<compile_context>
chip_gen: v7x
topology: tpu7x:2x2x1
jax: 0.10.0
libtpu: 0.0.40
codegen_flags: <defaults>
</compile_context>

<pallas_src>
import math
from functools import partial

import jax
import jax.numpy as jnp
from jax import lax
from jax.experimental import pallas as pl
from jax.experimental.pallas import tpu as pltpu


def _round_up(x, m):
    return ((x + m - 1) // m) * m


def _conv1d_im2col_kernel(x_cur_ref, x_halo_ref, w_ref, b_ref, o_ref, patch_ref, *,
                          stride, dilation, K, C_in_pad, TL):
    """One (batch, L-tile, C_out-tile) grid step.

    x_cur_ref : (1, C_in_pad, B_in)   contiguous input window for this L tile (bf16)
    x_halo_ref: (1, C_in_pad, H)      right halo: next 128-aligned chunk      (bf16)
    w_ref     : (CO_T, K*C_in_pad)    weights in im2col layout                (bf16)
    b_ref     : (CO_T, 1)             bias                                    (f32)
    o_ref     : (1, CO_T, TL)         output tile                             (f32)
    patch_ref : (K*C_in_pad, TL)      VMEM scratch im2col patch               (bf16)
    """
    xc = x_cur_ref[0]                                    # (C_in_pad, B_in)
    xh = x_halo_ref[0]                                   # (C_in_pad, H)

    if stride == 1:
        # Write each tap slab straight into the scratch patch: one full/partial
        # store from the current window plus a tiny tail store from the halo.
        for k in range(K):                               # K is small & static
            off = k * dilation
            r0 = k * C_in_pad
            if off == 0:
                patch_ref[r0:r0 + C_in_pad, :] = xc
            else:
                w1 = TL - off                            # off <= halo <= H <= TL
                if w1 > 0:
                    patch_ref[r0:r0 + C_in_pad, 0:w1] = xc[:, off:off + w1]
                patch_ref[r0:r0 + C_in_pad, w1:TL] = xh[:, 0:off]
    else:
        # TODO(synk): wrapper-side space-to-depth pre-decimation would turn these
        # lane-strided slices into contiguous ones; stride>1 is a cold path here.
        xw = jnp.concatenate([xc, xh], axis=-1)          # (C_in_pad, B_in + H)
        for k in range(K):
            start = k * dilation
            r0 = k * C_in_pad
            patch_ref[r0:r0 + C_in_pad, :] = lax.slice(
                xw, (0, start), (C_in_pad, start + (TL - 1) * stride + 1),
                (1, stride))

    # Single MXU matmul with contraction K*C_in_pad, f32 accumulation.
    acc = jnp.dot(w_ref[...], patch_ref[...], preferred_element_type=jnp.float32)
    acc = acc + b_ref[...]                               # (CO_T, 1) broadcast
    o_ref[0] = acc.astype(o_ref.dtype)


def conv1d_static_same_padding(x, weight, bias=None, *, stride=1, dilation=1,
                               groups=1, tile_l=2048, tile_co=128,
                               compute_dtype=jnp.bfloat16,
                               vmem_budget_bytes=40 * 1024 * 1024):
    """x: (N, C_in, L) f32; weight: (C_out, C_in, K); bias: (C_out,) or None."""
    if groups != 1:
        # TODO(synk): grouped convolution (nn.Conv1d groups>1) not implemented.
        raise NotImplementedError("groups > 1 is not implemented")

    N, C_in, L = x.shape
    C_out, C_in_w, K = weight.shape
    assert C_in_w == C_in, (C_in_w, C_in)

    # ---- exact replica of the module's padding math (uses shape[-2]!) ----
    h = x.shape[-2]
    extra = (math.ceil(h / stride) - 1) * stride - h + K
    left = extra // 2
    right = extra - left
    L1 = L + left + right                                 # length after "same" pad
    L_out = (L1 - dilation * (K - 1) - 1) // stride + 1

    # ---- tiling geometry --------------------------------------------------
    C_in_pad = _round_up(C_in, 16)                        # bf16 sublane packing
    KC = K * C_in_pad

    halo = max(1, dilation * (K - 1) + 1 - stride)        # extra cols past the tile
    H = _round_up(halo, 128)                              # aligned halo block

    CO_T = C_out if C_out <= tile_co else tile_co         # C_out tile
    C_out_pad = _round_up(C_out, CO_T)
    num_co = C_out_pad // CO_T

    # Output-length tile: as large as the VMEM budget allows.
    TL = min(tile_l, _round_up(L_out, 128))
    TL = _round_up(max(TL, 128), H)                       # multiple of 128 and H

    def vmem_usage(tl):
        b_in = tl * stride
        return (2 * C_in_pad * b_in * 2                   # x window, double-buffered
                + 2 * C_in_pad * H * 2                    # halo
                + 2 * CO_T * KC * 2                       # weights
                + 2 * CO_T * 4                            # bias
                + 2 * CO_T * tl * 4                       # f32 output
                + KC * tl * 2)                            # im2col scratch

    while TL > H and vmem_usage(TL) > vmem_budget_bytes:  # keeps v7x (64 MiB) safe
        TL = _round_up(TL // 2, H)

    # v7x has 2 TensorCores: guarantee >= 2 grid steps when possible.
    if N * pl.cdiv(L_out, TL) * num_co < 2 and L_out > H:
        TL = _round_up(pl.cdiv(L_out, 2), H)

    B_in = TL * stride                                    # input cols per L tile
    num_l = pl.cdiv(L_out, TL)
    L_pad_total = max(num_l * B_in + H, L1)
    hb = B_in // H                                        # halo-block units per tile

    # ---- one fused pass: bf16 cast + channel pad + "same" pad + alignment --
    right_total = L_pad_total - L - left
    x_pad = lax.pad(x.astype(compute_dtype), jnp.zeros((), compute_dtype),
                    [(0, 0, 0), (0, C_in_pad - C_in, 0), (left, right_total, 0)])

    # ---- weights in im2col layout: (C_out, K, C_in) -> (C_out_pad, K*C_in_pad)
    w2 = jnp.transpose(weight, (0, 2, 1))
    w2 = jnp.pad(w2, ((0, C_out_pad - C_out), (0, 0), (0, C_in_pad - C_in)))
    w2 = w2.reshape(C_out_pad, KC).astype(compute_dtype)
    if bias is None:
        b2 = jnp.zeros((C_out_pad, 1), jnp.float32)
    else:
        b2 = jnp.pad(bias.astype(jnp.float32),
                     (0, C_out_pad - C_out)).reshape(C_out_pad, 1)

    kernel = partial(_conv1d_im2col_kernel, stride=stride, dilation=dilation,
                     K=K, C_in_pad=C_in_pad, TL=TL)

    # ---- grid order: keep the LARGER operand resident between steps --------
    in_block_bytes = C_in_pad * (B_in + H) * 2
    w_block_bytes = CO_T * KC * 2
    co_inner = w_block_bytes <= in_block_bytes

    if co_inner:
        grid = (N, num_l, num_co)
        in_specs = [
            pl.BlockSpec((1, C_in_pad, B_in), lambda n, l, co: (n, 0, l)),
            pl.BlockSpec((1, C_in_pad, H), lambda n, l, co: (n, 0, (l + 1) * hb)),
            pl.BlockSpec((CO_T, KC), lambda n, l, co: (co, 0)),
            pl.BlockSpec((CO_T, 1), lambda n, l, co: (co, 0)),
        ]
        out_specs = pl.BlockSpec((1, CO_T, TL), lambda n, l, co: (n, co, l))
    else:
        grid = (N, num_co, num_l)
        in_specs = [
            pl.BlockSpec((1, C_in_pad, B_in), lambda n, co, l: (n, 0, l)),
            pl.BlockSpec((1, C_in_pad, H), lambda n, co, l: (n, 0, (l + 1) * hb)),
            pl.BlockSpec((CO_T, KC), lambda n, co, l: (co, 0)),
            pl.BlockSpec((CO_T, 1), lambda n, co, l: (co, 0)),
        ]
        out_specs = pl.BlockSpec((1, CO_T, TL), lambda n, co, l: (n, co, l))

    usage = vmem_usage(TL)
    vmem_limit = int(min(60 * 1024 * 1024, max(2 * usage, 32 * 1024 * 1024)))

    # TODO(synk): when num_co == 1 the wrapper pad+cast pass over x could be
    # fused into the kernel (read raw f32, mask pad columns with pl.when) to
    # cut input-side HBM traffic roughly in half.
    out = pl.pallas_call(
        kernel,
        # True output shape: trailing partial L / C_out blocks are masked on
        # write by Pallas (no post-kernel crop / HBM round trip).
        out_shape=jax.ShapeDtypeStruct((N, C_out, L_out), x.dtype),
        grid_spec=pltpu.PrefetchScalarGridSpec(
            num_scalar_prefetch=0,
            grid=grid,
            in_specs=in_specs,
            out_specs=out_specs,
            scratch_shapes=[pltpu.VMEM((KC, TL), compute_dtype)],
        ),
        compiler_params=pltpu.CompilerParams(
            dimension_semantics=("parallel", "parallel", "parallel"),
            vmem_limit_bytes=vmem_limit,
        ),
    )(x_pad, x_pad, w2, b2)

    return out


if __name__ == "__main__":
    key = jax.random.PRNGKey(0)
    kx, kw, kb = jax.random.split(key, 3)

    N, C_in, C_out, L, K = 2, 4, 8, 16, 3
    stride, dilation = 1, 1

    x = jax.random.normal(kx, (N, C_in, L), jnp.float32)

    # Deterministic parameter init mirroring the module's __init__:
    #   kaiming_normal_ on weight (fan_in mode, gain=sqrt(2)),
    #   default Conv1d bias init uniform(-1/sqrt(fan_in), 1/sqrt(fan_in)).
    fan_in = C_in * K
    weight = jax.random.normal(kw, (C_out, C_in, K), jnp.float32) * math.sqrt(2.0 / fan_in)
    bound = 1.0 / math.sqrt(fan_in)
    bias = jax.random.uniform(kb, (C_out,), jnp.float32, minval=-bound, maxval=bound)

    out = conv1d_static_same_padding(x, weight, bias, stride=stride, dilation=dilation)
    out = jax.block_until_ready(out)

    # Sanity check against lax conv (same padding math as the module).
    h = x.shape[-2]
    extra = (math.ceil(h / stride) - 1) * stride - h + K
    left = extra // 2
    right = extra - left
    x_ref = jnp.pad(x, ((0, 0), (0, 0), (left, right)))
    ref = lax.conv_general_dilated(
        x_ref, weight, window_strides=(stride,), padding="VALID",
        rhs_dilation=(dilation,), dimension_numbers=("NCH", "OIH", "NCH"),
    ) + bias[None, :, None]

    assert out.shape == ref.shape, (out.shape, ref.shape)
    # bf16 inputs with f32 accumulation -> loose-ish tolerance vs f32 reference.
    assert jnp.allclose(out, ref, atol=5e-2, rtol=5e-2), \
        float(jnp.max(jnp.abs(out - ref)))

    print("KERNEL_OK")
</pallas_src>

<mosaic_0001>
module attributes {stable_mosaic.version = 11 : i64} {
  func.func @_conv1d_im2col_kernel(%arg0: i32, %arg1: i32, %arg2: i32, %arg3: memref<1x16x128xbf16, #tpu.memory_space<vmem>>, %arg4: memref<1x16x128xbf16, #tpu.memory_space<vmem>>, %arg5: memref<8x48xbf16, #tpu.memory_space<vmem>>, %arg6: memref<8x1xf32, #tpu.memory_space<vmem>>, %arg7: memref<1x8x128xf32, #tpu.memory_space<vmem>>, %arg8: memref<48x128xbf16, #tpu.memory_space<vmem>>) attributes {dimension_semantics = [#tpu.dimension_semantics<parallel>, #tpu.dimension_semantics<parallel>, #tpu.dimension_semantics<parallel>], iteration_bounds = array<i64: 2, 1, 1>, scalar_prefetch = 0 : i64, scratch_operands = 1 : i64, tpu.core_type = #tpu.core_type<tc>, window_params = [{transform_indices = @transform_0, window_bounds = array<i64: 1, 16, 128>}, {transform_indices = @transform_1, window_bounds = array<i64: 1, 16, 128>}, {transform_indices = @transform_2, window_bounds = array<i64: 8, 48>}, {transform_indices = @transform_3, window_bounds = array<i64: 8, 1>}, {transform_indices = @transform_4, window_bounds = array<i64: 1, 8, 128>}]} {
    %c0 = arith.constant 0 : index
    %c0_0 = arith.constant 0 : index
    %c0_1 = arith.constant 0 : index
    %0 = vector.load %arg3[%c0, %c0_0, %c0_1] : memref<1x16x128xbf16, #tpu.memory_space<vmem>>, vector<1x16x128xbf16>
    %1 = vector.shape_cast %0 : vector<1x16x128xbf16> to vector<16x128xbf16>
    %c0_2 = arith.constant 0 : index
    %c0_3 = arith.constant 0 : index
    %c0_4 = arith.constant 0 : index
    %2 = vector.load %arg4[%c0_2, %c0_3, %c0_4] : memref<1x16x128xbf16, #tpu.memory_space<vmem>>, vector<1x16x128xbf16>
    %3 = vector.shape_cast %2 : vector<1x16x128xbf16> to vector<16x128xbf16>
    %c0_5 = arith.constant 0 : index
    %c0_6 = arith.constant 0 : index
    %4 = vector.load %arg8[%c0_5, %c0_6] : memref<48x128xbf16, #tpu.memory_space<vmem>>, vector<16x128xbf16>
    tpu.vector_store %arg8[%c0_5, %c0_6], %1 {strides = array<i32>} : memref<48x128xbf16, #tpu.memory_space<vmem>>, vector<16x128xbf16>,
    %5 = vector.extract_strided_slice %1 {offsets = [0, 1], sizes = [16, 127], strides = [1, 1]} : vector<16x128xbf16> to vector<16x127xbf16>
    %c16 = arith.constant 16 : index
    %c0_7 = arith.constant 0 : index
    %6 = vector.load %arg8[%c16, %c0_7] : memref<48x128xbf16, #tpu.memory_space<vmem>>, vector<16x127xbf16>
    tpu.vector_store %arg8[%c16, %c0_7], %5 {strides = array<i32>} : memref<48x128xbf16, #tpu.memory_space<vmem>>, vector<16x127xbf16>,
    %7 = vector.extract_strided_slice %3 {offsets = [0, 0], sizes = [16, 1], strides = [1, 1]} : vector<16x128xbf16> to vector<16x1xbf16>
    %c16_8 = arith.constant 16 : index
    %c127 = arith.constant 127 : index
    %8 = vector.load %arg8[%c16_8, %c127] : memref<48x128xbf16, #tpu.memory_space<vmem>>, vector<16x1xbf16>
    tpu.vector_store %arg8[%c16_8, %c127], %7 {strides = array<i32>} : memref<48x128xbf16, #tpu.memory_space<vmem>>, vector<16x1xbf16>,
    %9 = vector.extract_strided_slice %1 {offsets = [0, 2], sizes = [16, 126], strides = [1, 1]} : vector<16x128xbf16> to vector<16x126xbf16>
    %c32 = arith.constant 32 : index
    %c0_9 = arith.constant 0 : index
    %10 = vector.load %arg8[%c32, %c0_9] : memref<48x128xbf16, #tpu.memory_space<vmem>>, vector<16x126xbf16>
    tpu.vector_store %arg8[%c32, %c0_9], %9 {strides = array<i32>} : memref<48x128xbf16, #tpu.memory_space<vmem>>, vector<16x126xbf16>,
    %11 = vector.extract_strided_slice %3 {offsets = [0, 0], sizes = [16, 2], strides = [1, 1]} : vector<16x128xbf16> to vector<16x2xbf16>
    %c32_10 = arith.constant 32 : index
    %c126 = arith.constant 126 : index
    %12 = vector.load %arg8[%c32_10, %c126] : memref<48x128xbf16, #tpu.memory_space<vmem>>, vector<16x2xbf16>
    tpu.vector_store %arg8[%c32_10, %c126], %11 {strides = array<i32>} : memref<48x128xbf16, #tpu.memory_space<vmem>>, vector<16x2xbf16>,
    %c0_11 = arith.constant 0 : index
    %c0_12 = arith.constant 0 : index
    %13 = vector.load %arg5[%c0_11, %c0_12] : memref<8x48xbf16, #tpu.memory_space<vmem>>, vector<8x48xbf16>
    %c0_13 = arith.constant 0 : index
    %c0_14 = arith.constant 0 : index
    %14 = vector.load %arg8[%c0_13, %c0_14] : memref<48x128xbf16, #tpu.memory_space<vmem>>, vector<48x128xbf16>
    %cst = arith.constant dense<0.000000e+00> : vector<8x128xf32>
    %15 = tpu.matmul %13, %14, %cst {dimension_numbers = #tpu.dot_dimension_numbers<[1], [0], [0], [1], [0, 0, 1, 1], [], []>} : vector<8x48xbf16>, vector<48x128xbf16>, vector<8x128xf32> -> vector<8x128xf32>
    %c0_15 = arith.constant 0 : index
    %c0_16 = arith.constant 0 : index
    %16 = vector.load %arg6[%c0_15, %c0_16] : memref<8x1xf32, #tpu.memory_space<vmem>>, vector<8x1xf32>
    %17 = vector.broadcast %16 : vector<8x1xf32> to vector<8x128xf32>
    %18 = arith.addf %15, %17 : vector<8x128xf32>
    %c0_17 = arith.constant 0 : index
    %c0_18 = arith.constant 0 : index
    %c0_19 = arith.constant 0 : index
    %19 = vector.load %arg7[%c0_17, %c0_18, %c0_19] : memref<1x8x128xf32, #tpu.memory_space<vmem>>, vector<1x8x128xf32>
    %20 = vector.shape_cast %19 : vector<1x8x128xf32> to vector<8x128xf32>
    %21 = vector.shape_cast %18 : vector<8x128xf32> to vector<1x8x128xf32>
    tpu.vector_store %arg7[%c0_17, %c0_18, %c0_19], %21 {strides = array<i32>} : memref<1x8x128xf32, #tpu.memory_space<vmem>>, vector<1x8x128xf32>,
    return
  }
  func.func @transform_0(%arg0: i32, %arg1: i32, %arg2: i32) -> (i32, i32, i32) {
    %c0_i32 = arith.constant 0 : i32
    %c0_i32_0 = arith.constant 0 : i32
    return %arg0, %c0_i32, %arg1 : i32, i32, i32
  }
  func.func @transform_1(%arg0: i32, %arg1: i32, %arg2: i32) -> (i32, i32, i32) {
    %c1_i32 = arith.constant 1 : i32
    %0 = arith.addi %arg1, %c1_i32 : i32
    %c1_i32_0 = arith.constant 1 : i32
    %1 = arith.muli %0, %c1_i32_0 : i32
    %c0_i32 = arith.constant 0 : i32
    %c0_i32_1 = arith.constant 0 : i32
    return %arg0, %c0_i32, %1 : i32, i32, i32
  }
  func.func @transform_2(%arg0: i32, %arg1: i32, %arg2: i32) -> (i32, i32) {
    %c0_i32 = arith.constant 0 : i32
    %c0_i32_0 = arith.constant 0 : i32
    return %arg2, %c0_i32 : i32, i32
  }
  func.func @transform_3(%arg0: i32, %arg1: i32, %arg2: i32) -> (i32, i32) {
    %c0_i32 = arith.constant 0 : i32
    %c0_i32_0 = arith.constant 0 : i32
    return %arg2, %c0_i32 : i32, i32
  }
  func.func @transform_4(%arg0: i32, %arg1: i32, %arg2: i32) -> (i32, i32, i32) {
    %c0_i32 = arith.constant 0 : i32
    return %arg0, %arg2, %arg1 : i32, i32, i32
  }
}

</mosaic_0001>

<llo_original>
// kernel: tpu_custom_call.1
$region0: #{tpu_custom_call.1}
  #allocation0 [shape = 'u32[]', space=smem, size = 0x4, offset = 0x4, fixed_abs, tag = 'smem constant byte address 0x4 - core index']
  #allocation1 [shape = 'u32[144,128]{1,0:T(1,128)}', space=vmem, size = 0x12000, scoped, tag = 'internal scratch']
  #allocation2 [shape = 'bf16[48,128]{1,0:T(16,128)(2,1)}', space=vmem, size = 0x3000, scoped, tag = 'scratch operand']
  %s0 = inlined_call_operand.hbm [shape: bf16[2,16,256], index: 0, kind: input, shape index: {}]
  %s1 = inlined_call_operand.hbm [shape: bf16[2,16,256], index: 1, kind: input, shape index: {}]
  %s2 = inlined_call_operand.vmem [shape: bf16[8,48], index: 2, kind: input, shape index: {}]
  %s3 = inlined_call_operand.vmem [shape: f32[8,1], index: 3, kind: input, shape index: {}]
  %s4 = inlined_call_operand.hbm [shape: f32[2,8,16], index: 4, kind: output, shape index: {}]
  %s5 = sld [smem:[#allocation0]]
  $region57: #{tpu_custom_call.1} parent=0
    _
  %s7 = ssub.s32 1, %s5
  %s8 = scalar_select 0, %s7, %s5
  $region1: #{tpu_custom_call.1} parent=0
    #allocation3 [shape = 'u8[8192]{0}', space=vmem, size = 0x2000, scoped, tag = 'input window, operand 0']
    #allocation4 [shape = 's32[2]{0}', space=sflag, size = 0x8, scoped, tag = 'scoped memory for tpu_custom_call.1']
    #allocation5 [shape = 's32[2]{0}', space=sflag, size = 0x8, scoped, tag = 'scoped memory for tpu_custom_call.1']
    #allocation6 [shape = 'u8[8192]{0}', space=vmem, size = 0x2000, scoped, tag = 'input window, operand 1']
    #allocation7 [shape = 's32[2]{0}', space=sflag, size = 0x8, scoped, tag = 'scoped memory for tpu_custom_call.1']
    #allocation8 [shape = 'u8[8192]{0}', space=vmem, size = 0x2000, scoped, tag = 'output window, operand 0']
    %9 = vsyncpa [#allocation4], 0
    %s10 = scalar_lea.sflag [#allocation4], 1
    %11 = vsyncpa %s10, 0
    %12 = vsyncpa [#allocation7], 0
    %s13 = scalar_lea.sflag [#allocation7], 1
    %14 = vsyncpa %s13, 0
    %15 = vsyncpa [#allocation5], 0
    %s16 = scalar_lea.sflag [#allocation5], 1
    %17 = vsyncpa %s16, 0
    loop: start=0, step=1, limit=4
    $region2: #{tpu_custom_call.1} parent=1 // loop_pre_header
      _
    $region3: #{tpu_custom_call.1} parent=1 // loop_header
      %s19 = sphi 0, %s23
      %p20 = scmp.ge.s32.totalorder %s19, 4
      %s26 = sphi 0, %s45
      %s27 = sphi 0, %s41
      %s28 = sphi 0, %s37
      %s29 = sphi 0, %s26
      %s30 = sphi 0, %s27
      %s31 = sphi 0, %s28
      %s32 = sphi 0, %s29
      %s33 = sphi 0, %s30
      %s34 = sphi 0, %s31
      %s50 = sphi 0, %s52
      %s53 = sphi 0, %s50
      %s54 = sphi 0, %s53
      %s70 = sphi 0, %s54
      %s80 = sphi 0, %s82
      %s83 = sphi 0, %s80
      %s84 = sphi 0, %s83
      %s100 = sphi 0, %s84
      %s106 = sphi 0, %s108
      %s109 = sphi 0, %s106
      %s110 = sphi 0, %s109
      %s126 = sphi 0, %s110
      %s132 = sphi 0, %s134
      %s135 = sphi 0, %s132
      %s136 = sphi 0, %s135
      %s152 = sphi 0, %s136
      %s162 = sphi 0, %s164
      %s165 = sphi 0, %s162
      %s166 = sphi 0, %s165
      %s182 = sphi 0, %s166
    $region4: #{tpu_custom_call.1} parent=1 // loop_header_branch
      %22 = sbr.rel (%p20) target = $region8
    $region5: #{tpu_custom_call.1} parent=1 // loop_body
      %s24 = ssub.s32 %s19, 1
      %s25 = ssub.s32 %s19, 2
      %s35 = sadd.s32 1, %s28
      %p36 = scmp.ge.s32.totalorder %s35, 1
      %s37 = scalar_select %p36, 0, %s35
      %s38 = sadd.s32 1, %s27
      %s39 = scalar_select %p36, %s38, %s27
      %p40 = scmp.ge.s32.totalorder %s39, 1
      %s41 = scalar_select %p40, 0, %s39
      %s42 = sadd.s32 1, %s26
      %s43 = scalar_select %p40, %s42, %s26
      %p44 = scmp.ge.s32.totalorder %s43, 2
      %s45 = scalar_select %p44, 0, %s43
      %s46 = ssub.s32 %s26, %s45
      %s47 = ssub.s32 %s27, %s41
      %s48 = sor.u32 %s46, %s47
      %p49 = scmp.eq.s32.totalorder %s48, 0
      %s51 = sadd.s32 %s50, 1
      %s52 = scalar_select %p49, %s50, %s51
      %p55 = pneg %p49
      %p56 = scmp.eq.s32.totalorder %s19, 1
      %p57 = por %p55, %p56
      %p58 = scmp.ne.s32.totalorder %s50, %s53
      %p59 = scmp.eq.s32.totalorder %s19, 0
      %p60 = por %p58, %p59
      %p61 = scmp.ne.s32.totalorder %s50, %s53
      %p62 = scmp.eq.s32.totalorder %s24, 1
      %p63 = por %p61, %p62
      %p64 = scmp.ne.s32.totalorder %s53, %s54
      %p65 = scmp.eq.s32.totalorder %s24, 0
      %p66 = por %p64, %p65
      %p67 = scmp.ne.s32.totalorder %s53, %s54
      %p68 = scmp.eq.s32.totalorder %s25, 1
      %p69 = por %p67, %p68
      %p71 = scmp.ne.s32.totalorder %s54, %s70
      %p72 = scmp.eq.s32.totalorder %s25, 0
      %p73 = por %p71, %p72
      %s74 = sadd.s32 %s27, 1
      %s75 = sadd.s32 %s41, 1
      %s76 = ssub.s32 %s26, %s45
      %s77 = ssub.s32 %s74, %s75
      %s78 = sor.u32 %s76, %s77
      %p79 = scmp.eq.s32.totalorder %s78, 0
      %s81 = sadd.s32 %s80, 1
      %s82 = scalar_select %p79, %s80, %s81
      %p85 = pneg %p79
      %p86 = scmp.eq.s32.totalorder %s19, 1
      %p87 = por %p85, %p86
      %p88 = scmp.ne.s32.totalorder %s80, %s83
      %p89 = scmp.eq.s32.totalorder %s19, 0
      %p90 = por %p88, %p89
      %p91 = scmp.ne.s32.totalorder %s80, %s83
      %p92 = scmp.eq.s32.totalorder %s24, 1
      %p93 = por %p91, %p92
      %p94 = scmp.ne.s32.totalorder %s83, %s84
      %p95 = scmp.eq.s32.totalorder %s24, 0
      %p96 = por %p94, %p95
      %p97 = scmp.ne.s32.totalorder %s83, %s84
      %p98 = scmp.eq.s32.totalorder %s25, 1
      %p99 = por %p97, %p98
      %p101 = scmp.ne.s32.totalorder %s84, %s100
      %p102 = scmp.eq.s32.totalorder %s25, 0
      %p103 = por %p101, %p102
      %s104 = ssub.s32 %s28, %s37
      %p105 = scmp.eq.s32.totalorder %s104, 0
      %s107 = sadd.s32 %s106, 1
      %s108 = scalar_select %p105, %s106, %s107
      %p111 = pneg %p105
      %p112 = scmp.eq.s32.totalorder %s19, 1
      %p113 = por %p111, %p112
      %p114 = scmp.ne.s32.totalorder %s106, %s109
      %p115 = scmp.eq.s32.totalorder %s19, 0
      %p116 = por %p114, %p115
      %p117 = scmp.ne.s32.totalorder %s106, %s109
      %p118 = scmp.eq.s32.totalorder %s24, 1
      %p119 = por %p117, %p118
      %p120 = scmp.ne.s32.totalorder %s109, %s110
      %p121 = scmp.eq.s32.totalorder %s24, 0
      %p122 = por %p120, %p121
      %p123 = scmp.ne.s32.totalorder %s109, %s110
      %p124 = scmp.eq.s32.totalorder %s25, 1
      %p125 = por %p123, %p124
      %p127 = scmp.ne.s32.totalorder %s110, %s126
      %p128 = scmp.eq.s32.totalorder %s25, 0
      %p129 = por %p127, %p128
      %s130 = ssub.s32 %s28, %s37
      %p131 = scmp.eq.s32.totalorder %s130, 0
      %s133 = sadd.s32 %s132, 1
      %s134 = scalar_select %p131, %s132, %s133
      %p137 = pneg %p131
      %p138 = scmp.eq.s32.totalorder %s19, 1
      %p139 = por %p137, %p138
      %p140 = scmp.ne.s32.totalorder %s132, %s135
      %p141 = scmp.eq.s32.totalorder %s19, 0
      %p142 = por %p140, %p141
      %p143 = scmp.ne.s32.totalorder %s132, %s135
      %p144 = scmp.eq.s32.totalorder %s24, 1
      %p145 = por %p143, %p144
      %p146 = scmp.ne.s32.totalorder %s135, %s136
      %p147 = scmp.eq.s32.totalorder %s24, 0
      %p148 = por %p146, %p147
      %p149 = scmp.ne.s32.totalorder %s135, %s136
      %p150 = scmp.eq.s32.totalorder %s25, 1
      %p151 = por %p149, %p150
      %p153 = scmp.ne.s32.totalorder %s136, %s152
      %p154 = scmp.eq.s32.totalorder %s25, 0
      %p155 = por %p153, %p154
      %s156 = ssub.s32 %s26, %s45
      %s157 = ssub.s32 %s28, %s37
      %s158 = sor.u32 %s156, %s157
      %s159 = ssub.s32 %s27, %s41
      %s160 = sor.u32 %s158, %s159
      %p161 = scmp.eq.s32.totalorder %s160, 0
      %s163 = sadd.s32 %s162, 1
      %s164 = scalar_select %p161, %s162, %s163
      %p167 = pneg %p161
      %p168 = scmp.eq.s32.totalorder %s19, 1
      %p169 = por %p167, %p168
      %p170 = scmp.ne.s32.totalorder %s162, %s165
      %p171 = scmp.eq.s32.totalorder %s19, 0
      %p172 = por %p170, %p171
      %p173 = scmp.ne.s32.totalorder %s162, %s165
      %p174 = scmp.eq.s32.totalorder %s24, 1
      %p175 = por %p173, %p174
      %p176 = scmp.ne.s32.totalorder %s165, %s166
      %p177 = scmp.eq.s32.totalorder %s24, 0
      %p178 = por %p176, %p177
      %p179 = scmp.ne.s32.totalorder %s165, %s166
      %p180 = scmp.eq.s32.totalorder %s25, 1
      %p181 = por %p179, %p180
      %p183 = scmp.ne.s32.totalorder %s166, %s182
      %p184 = scmp.eq.s32.totalorder %s25, 0
      %p185 = por %p183, %p184
      %p186 = scmp.le.s32.totalorder 1, %s19
      %p187 = scmp.lt.s32.totalorder %s19, 3
      %p188 = pnand %p186, %p187
      %p189 = pneg %p188
      // Predicated region
      $region9: #{tpu_custom_call.1} parent=5 // pred_check
        _
      $region10: #{tpu_custom_call.1} parent=5 // pred_check_branch
        %191 = sbr.rel (%p188) target = $region12
      $region11: #{tpu_custom_call.1} parent=5 // pred_region
        %s192 = ssub.s32 %s19, 1
        // Predicated region
        $region13: #{tpu_custom_call.1} parent=11 // pred_check
          %p193 = pneg %p122
        $region14: #{tpu_custom_call.1} parent=11 // pred_check_branch
          %195 = sbr.rel (%p193) target = $region16
        $region15: #{tpu_custom_call.1} parent=11 // pred_region
          %p196 = scmp.lt.s32.totalorder %s31, 0
          %s197 = scalar_select %p196, %s31, 0
          %s198 = smul.addr %s197, 4
          %s199 = scalar_lea.vmem %s2, %s198
        $region16: #{tpu_custom_call.1} parent=11 // pred_fallthru
          _
        // Predicated region
        $region17: #{tpu_custom_call.1} parent=11 // pred_check
          %p200 = pneg %p148
        $region18: #{tpu_custom_call.1} parent=11 // pred_check_branch
          %202 = sbr.rel (%p200) target = $region20
        $region19: #{tpu_custom_call.1} parent=11 // pred_region
          %p203 = scmp.lt.s32.totalorder %s31, 0
          %s204 = scalar_select %p203, %s31, 0
          %s205 = smul.addr %s204, 8
          %s206 = scalar_lea.vmem %s3, %s205
        $region20: #{tpu_custom_call.1} parent=11 // pred_fallthru
          _
      $region12: #{tpu_custom_call.1} parent=5 // pred_fallthru
        _
      %p207 = scmp.lt.s32.totalorder %s19, 2
      // Predicated region
      $region21: #{tpu_custom_call.1} parent=5 // pred_check
        %p208 = pneg %p207
      $region22: #{tpu_custom_call.1} parent=5 // pred_check_branch
        %210 = sbr.rel (%p208) target = $region24
      $region23: #{tpu_custom_call.1} parent=5 // pred_region
        // Predicated region
        $region25: #{tpu_custom_call.1} parent=23 // pred_check
          %p211 = pneg %p60
        $region26: #{tpu_custom_call.1} parent=23 // pred_check_branch
          %213 = sbr.rel (%p211) target = $region28
        $region27: #{tpu_custom_call.1} parent=23 // pred_region
          %s214 = sand.u32 %s50, 1
          %s215 = scalar_lea.sflag [#allocation4], %s214
          %s216 = sand.u32 %s50, 1
          %s217 = smul.addr %s216, 8
          %s218 = scalar_lea.vmem [#allocation3], %s217
          %s220 = ssub.s32 128, 128
          %221 = vsyncadd %s215, %s220
          %s222 = smul.addr %s26, 4
          %s223 = sadd.s32 %s27, %s222
          %s224 = smul.addr %s223, 64
          %s225 = scalar_lea.hbm %s0, %s224
          %s226 = sshll.u32 %s218, 4
          %s227 = int_to_ptr.vmem [resolvable:$true] %s226
          %232 = dma.hbm_to_vmem [thread:$0]  %s225, 128, %s227, %s215, 128, 64, 4
        $region28: #{tpu_custom_call.1} parent=23 // pred_fallthru
          _
        // Predicated region
        $region29: #{tpu_custom_call.1} parent=23 // pred_check
          %p233 = pneg %p90
        $region30: #{tpu_custom_call.1} parent=23 // pred_check_branch
          %235 = sbr.rel (%p233) target = $region32
        $region31: #{tpu_custom_call.1} parent=23 // pred_region
          %s236 = sand.u32 %s80, 1
          %s237 = scalar_lea.sflag [#allocation7], %s236
          %s238 = sand.u32 %s80, 1
          %s239 = smul.addr %s238, 8
          %s240 = scalar_lea.vmem [#allocation6], %s239
          %s241 = sadd.s32 %s27, 1
          %s243 = ssub.s32 128, 128
          %244 = vsyncadd %s237, %s243
          %s245 = smul.addr %s26, 4
          %s246 = sadd.s32 %s241, %s245
          %s247 = smul.addr %s246, 64
          %s248 = scalar_lea.hbm %s1, %s247
          %s249 = sshll.u32 %s240, 4
          %s250 = int_to_ptr.vmem [resolvable:$true] %s249
          %255 = dma.hbm_to_vmem [thread:$0]  %s248, 128, %s250, %s237, 128, 64, 4
        $region32: #{tpu_custom_call.1} parent=23 // pred_fallthru
          _
      $region24: #{tpu_custom_call.1} parent=5 // pred_fallthru
        _
      %p256 = scmp.le.s32.totalorder 1, %s19
      %p257 = scmp.lt.s32.totalorder %s19, 3
      %p258 = pnand %p256, %p257
      %p259 = pneg %p258
      // Predicated region
      $region33: #{tpu_custom_call.1} parent=5 // pred_check
        _
      $region34: #{tpu_custom_call.1} parent=5 // pred_check_branch
        %261 = sbr.rel (%p258) target = $region36
      $region35: #{tpu_custom_call.1} parent=5 // pred_region
        %s262 = ssub.s32 %s19, 1
        %s263 = sand.u32 %s53, 1
        %s264 = scalar_lea.sflag [#allocation4], %s263
        %s265 = sand.u32 %s53, 1
        %s266 = smul.addr %s265, 8
        %s267 = scalar_lea.vmem [#allocation3], %s266
        // Predicated region
        $region37: #{tpu_custom_call.1} parent=35 // pred_check
          %p268 = pneg %p66
        $region38: #{tpu_custom_call.1} parent=35 // pred_check_branch
          %270 = sbr.rel (%p268) target = $region40
        $region39: #{tpu_custom_call.1} parent=35 // pred_region
          %271 = dma.done %s264, 128
        $region40: #{tpu_custom_call.1} parent=35 // pred_fallthru
          _
        %s272 = sand.u32 %s83, 1
        %s273 = scalar_lea.sflag [#allocation7], %s272
        %s274 = sand.u32 %s83, 1
        %s275 = smul.addr %s274, 8
        %s276 = scalar_lea.vmem [#allocation6], %s275
        // Predicated region
        $region41: #{tpu_custom_call.1} parent=35 // pred_check
          %p277 = pneg %p96
        $region42: #{tpu_custom_call.1} parent=35 // pred_check_branch
          %279 = sbr.rel (%p277) target = $region44
        $region43: #{tpu_custom_call.1} parent=35 // pred_region
          %280 = dma.done %s273, 128
        $region44: #{tpu_custom_call.1} parent=35 // pred_fallthru
          _
        %s281 = sand.u32 %s53, 1
        %s282 = scalar_lea.sflag [#allocation4], %s281
        %s283 = sand.u32 %s53, 1
        %s284 = smul.addr %s283, 8
        %s285 = scalar_lea.vmem [#allocation3], %s284
        %p286 = pneg %p66
        %p287 = pneg %p63
        %s288 = sand.u32 %s83, 1
        %s289 = scalar_lea.sflag [#allocation7], %s288
        %s290 = sand.u32 %s83, 1
        %s291 = smul.addr %s290, 8
        %s292 = scalar_lea.vmem [#allocation6], %s291
        %p293 = pneg %p96
        %p294 = pneg %p93
        %p295 = scmp.lt.s32.totalorder %s31, 0
        %s296 = scalar_select %p295, %s31, 0
        %s297 = smul.addr %s296, 4
        %s298 = scalar_lea.vmem %s2, %s297
        %p299 = pneg %p122
        %p300 = pneg %p119
        %p301 = scmp.lt.s32.totalorder %s31, 0
        %s302 = scalar_select %p301, %s31, 0
        %s303 = smul.addr %s302, 8
        %s304 = scalar_lea.vmem %s3, %s303
        %p305 = pneg %p148
        %p306 = pneg %p145
        %p307 = pneg %p178
        %p308 = pneg %p175
        %s309 = sand.u32 %s165, 1
        %s310 = scalar_lea.sflag [#allocation5], %s309
        %s311 = sand.u32 %s165, 1
        %s312 = smul.addr %s311, 8
        %s313 = scalar_lea.vmem [#allocation8], %s312
        %s314 = sadd.s32 %s30, 1
        %p315 = scmp.lt.s32.totalorder %s31, 0
        %s316 = scalar_select %p315, %s31, 0
        %s317 = smul.addr %s316, 4
        %s318 = scalar_lea.vmem %s2, %s317
        %p319 = scmp.lt.s32.totalorder %s31, 0
        %s320 = scalar_select %p319, %s31, 0
        %s321 = smul.addr %s320, 8
        %s322 = scalar_lea.vmem %s3, %s321
        %v324 = vld [vmem:[%s267] sm:$0xf]
        %v325 = vld [vmem:[%s267 + $0x4] sm:$0xf]
        %v326 = vld [vmem:[%s276] sm:$0xf]
        %v327 = vld [vmem:[%s276 + $0x4] sm:$0xf]
        %v330 = vunpack.c.l.b16 %v324
        %v331 = vunpack.c.l.b16 %v325
        %v332 = vpack.c.b16 %v331, %v330
        %334 = vst [vmem:[#allocation2] sm:$0xff] %v332
        %335 = vrot.lane.b32.xlu0 %v332, 127
        %v336 = vpop.permute.xlu0 %335
        %vm338 = vcmask 1039360
        %339 = vst.msk [vmem:[#allocation2 + $0x8] sm:$0xff] %vm338, %v336
        %v342 = vunpack.c.l.b16 %v326
        %v343 = vunpack.c.l.b16 %v327
        %v344 = vpack.c.b16 %v343, %v342
        %345 = vrot.lane.b32.xlu0 %v344, 127
        %v346 = vpop.permute.xlu0 %345
        %vm348 = vcmask 1048568
        %349 = vst.msk [vmem:[#allocation2 + $0x8] sm:$0xff] %vm348, %v346
        %350 = vrot.lane.b32.xlu0 %v332, 126
        %v351 = vpop.permute.xlu0 %350
        %vm353 = vcmask 1031168
        %354 = vst.msk [vmem:[#allocation2 + $0x10] sm:$0xff] %vm353, %v351
        %355 = vrot.lane.b32.xlu0 %v344, 126
        %v356 = vpop.permute.xlu0 %355
        %vm358 = vcmask 1048560
        %359 = vst.msk [vmem:[#allocation2 + $0x10] sm:$0xff] %vm358, %v356
        %v360 = vld [vmem:[%s318] sm:$0xf]
        %v361 = vld [vmem:[#allocation2] sm:$0xff]
        %v362 = vld [vmem:[#allocation2 + $0x8] sm:$0xff]
        %v363 = vld [vmem:[#allocation2 + $0x10] sm:$0xff]
        %v364 = vld [vmem:[%s322] sm:$0xff]
        %366 = vset.pattern.permute.xlu0 0
        %367 = vperm.xlu0 %366, %v364
        %v368 = vpop.permute.xlu0 %367
        %vm370 = vcmask 392192
        %v372 = vsel %vm370, %v360, 0
        %374 = vmatprep.subr.bf16.mxu0 0
        %375 = vmatpush1.bf16.msra.mxu0 %v361
        %376 = vmatprep.subr.bf16.mxu0 0
        %377 = vmatpush1.bf16.msra.mxu0 %v362
        %378 = vmatprep.subr.bf16.mxu0 0
        %379 = vmatpush1.bf16.msra.mxu0 %v363
        %380 = vmatprep.subr.bf16.mxu0 0
        %381 = vmatpush1.bf16.msra.mxu0 0
        %382 = vmatprep.subr.bf16.mxu0 0
        %383 = vmatpush1.bf16.msra.mxu0 0
        %384 = vmatprep.subr.bf16.mxu0 0
        %385 = vmatpush1.bf16.msra.mxu0 0
        %386 = vmatprep.subr.bf16.mxu0 0
        %387 = vmatpush1.bf16.msra.mxu0 0
        %388 = vmatprep.subr.bf16.mxu0 0
        %389 = vmatpush1.bf16.msra.mxu0 0
        %390 = vmatprep.subr.bf16.mxu0 0
        %391 = vmatpush1.bf16.msra.mxu0 0
        %392 = vmatprep.subr.bf16.mxu0 0
        %393 = vmatpush1.bf16.msra.mxu0 0
        %394 = vmatprep.subr.bf16.mxu0 0
        %395 = vmatpush1.bf16.msra.mxu0 0
        %396 = vmatprep.subr.bf16.mxu0 0
        %397 = vmatpush1.bf16.msra.mxu0 0
        %398 = vmatprep.subr.bf16.mxu0 0
        %399 = vmatpush1.bf16.msra.mxu0 0
        %400 = vmatprep.subr.bf16.mxu0 0
        %401 = vmatpush1.bf16.msra.mxu0 0
        %402 = vmatprep.subr.bf16.mxu0 0
        %403 = vmatpush1.bf16.msra.mxu0 0
        %404 = vmatprep.subr.bf16.mxu0 0
        %405 = vmatpush1.bf16.msra.mxu0 0
        %406 = vmatprep.mubr.bf16.mxu0 0
        %407 = vmatmul.mubr.bf16.gmra.mrb[0].mxu0 %v372
        %v408 = vpop.f32.mrb[0].mxu0
        %v409 = vadd.f32 %v368, %v408
        %v410 = vpop.f32.mrb[0].mxu0
        %v411 = vpop.f32.mrb[0].mxu0
        %v412 = vpop.f32.mrb[0].mxu0
        %413 = vdwg.mxu0
        %414 = vst [vmem:[%s313] sm:$0xff] %v409
        %s415 = sand.u32 %s165, 1
        %s416 = scalar_lea.sflag [#allocation5], %s415
        %s417 = sand.u32 %s165, 1
        %s418 = smul.addr %s417, 8
        %s419 = scalar_lea.vmem [#allocation8], %s418
        // Predicated region
        $region45: #{tpu_custom_call.1} parent=35 // pred_check
          %p420 = pneg %p175
        $region46: #{tpu_custom_call.1} parent=35 // pred_check_branch
          %422 = sbr.rel (%p420) target = $region48
        $region47: #{tpu_custom_call.1} parent=35 // pred_region
          %s424 = ssub.s32 128, 128
          %425 = vsyncadd %s416, %s424
          %s426 = sadd.s32 %s30, %s31
          %s427 = sadd.s32 %s426, %s29
          %s428 = smul.addr %s427, 128
          %s429 = scalar_lea.hbm %s4, %s428
          %s431 = sshll.u32 %s419, 4
          %s432 = int_to_ptr.vmem [resolvable:$true] %s431
          %434 = dma.vmem_to_hbm [thread:$0]  %s432, 128, %s429, %s416
        $region48: #{tpu_custom_call.1} parent=35 // pred_fallthru
          _
      $region36: #{tpu_custom_call.1} parent=5 // pred_fallthru
        _
      %p435 = scmp.le.s32.totalorder 2, %s19
      // Predicated region
      $region49: #{tpu_custom_call.1} parent=5 // pred_check
        %p436 = pneg %p435
      $region50: #{tpu_custom_call.1} parent=5 // pred_check_branch
        %438 = sbr.rel (%p436) target = $region52
      $region51: #{tpu_custom_call.1} parent=5 // pred_region
        %s439 = ssub.s32 %s19, 2
        // Predicated region
        $region53: #{tpu_custom_call.1} parent=51 // pred_check
          %p440 = pneg %p181
        $region54: #{tpu_custom_call.1} parent=51 // pred_check_branch
          %442 = sbr.rel (%p440) target = $region56
        $region55: #{tpu_custom_call.1} parent=51 // pred_region
          %s443 = sand.u32 %s166, 1
          %s444 = scalar_lea.sflag [#allocation5], %s443
          %s445 = sand.u32 %s166, 1
          %s446 = smul.addr %s445, 8
          %s447 = scalar_lea.vmem [#allocation8], %s446
          %448 = dma.done %s444, 128
        $region56: #{tpu_custom_call.1} parent=51 // pred_fallthru
          _
      $region52: #{tpu_custom_call.1} parent=5 // pred_fallthru
        _
    $region6: #{tpu_custom_call.1} parent=1 // loop_footer
      %s23 = sadd.s32 1, %s19
    $region7: #{tpu_custom_call.1} parent=1 // loop_footer_branch
      %18 = sbr.rel target = $region3
    $region8: #{tpu_custom_call.1} parent=1 // loop_exit
      _
    %449 = vsyncpa [#allocation4], 1
    %s450 = scalar_lea.sflag [#allocation4], 1
    %451 = vsyncpa %s450, 1
    %452 = vsyncpa [#allocation7], 1
    %s453 = scalar_lea.sflag [#allocation7], 1
    %454 = vsyncpa %s453, 1
    %455 = vsyncpa [#allocation5], 1
    %s456 = scalar_lea.sflag [#allocation5], 1
    %457 = vsyncpa %s456, 1

</llo_original>
